<compile_context>
chip_gen: v6e
topology: v6e:2x2x1
jax: 0.10.0
libtpu: 0.0.40
codegen_flags: <defaults>
</compile_context>

<pallas_src>
import jax
import jax.numpy as jnp
from jax import lax
from jax.experimental import pallas as pl
from jax.experimental.pallas import tpu as pltpu


# ----------------------------------------------------------------------------
# Kernels
# ----------------------------------------------------------------------------

def _linear_out1_kernel(z_ref, w_ref, b_ref, o_ref):
    """OUT == 1: VPU broadcast-multiply + XLU lane reduce, lane-dense [1, B] out."""
    # z_ref: [B, IN] VMEM, w_ref: [1, IN] VMEM, b_ref: [1] SMEM, o_ref: [1, B] VMEM
    prod = z_ref[...].astype(jnp.float32) * w_ref[...].astype(jnp.float32)  # [B, IN]
    acc = jnp.sum(prod, axis=-1, keepdims=True)                             # [B, 1] f32
    acc_t = jnp.transpose(acc, (1, 0))                                      # [1, B] lane-dense
    o_ref[...] = (acc_t + b_ref[0]).astype(o_ref.dtype)


def _linear_small_out_kernel(z_ref, w_ref, b_ref, o_ref):
    """2 <= OUT <= 8: still VPU/XLU -- the MXU is wasted far below native width."""
    # z_ref: [B, IN], w_ref: [OUT, IN], b_ref: [1, OUT], o_ref: [B, OUT]
    z = z_ref[...].astype(jnp.float32)[:, None, :]        # [B, 1, IN]
    w = w_ref[...].astype(jnp.float32)[None, :, :]        # [1, OUT, IN]
    acc = jnp.sum(z * w, axis=-1)                          # [B, OUT] f32 accumulation
    o_ref[...] = (acc + b_ref[...].astype(jnp.float32)).astype(o_ref.dtype)


def _linear_mxu_kernel(z_ref, w_ref, b_ref, o_ref):
    """OUT > 8: MXU matmul.  W stays in PyTorch [OUT, IN] layout; IN contracted
    directly (NT).  At MXU-scale OUT/IN a cached pre-transposed [IN, OUT] weight
    would avoid a per-call XLU transpose; neutral at these shapes."""
    acc = lax.dot_general(
        z_ref[...], w_ref[...],
        dimension_numbers=(((1,), (1,)), ((), ())),
        preferred_element_type=jnp.float32,
    )
    o_ref[...] = (acc + b_ref[...]).astype(o_ref.dtype)


def _batched_out1_kernel(z_ref, w_ref, b_ref, o_ref):
    """Many independent OUT=1 subnets; one grid step handles a tile of subnets."""
    # z_ref: [TS, B, IN], w_ref: [TS, IN], b_ref: [1, TS], o_ref: [B, TS]
    z = z_ref[...].astype(jnp.float32)                     # [TS, B, IN]
    w = w_ref[...].astype(jnp.float32)[:, None, :]         # [TS, 1, IN]
    acc = jnp.sum(z * w, axis=-1)                          # [TS, B] f32
    out_t = jnp.transpose(acc, (1, 0))                     # [B, TS] lane-dense over subnets
    o_ref[...] = (out_t + b_ref[...]).astype(o_ref.dtype)


# ----------------------------------------------------------------------------
# Wrappers
# ----------------------------------------------------------------------------

def _row_tile(B):
    """Row tile for the MXU path: bounds per-block VMEM (v7x has 64 MiB)."""
    if B <= 128:
        return B
    for tb in (256, 128, 64, 32, 16, 8):
        if B % tb == 0:
            return tb
    return B


def subnet_forward(z, w, b):
    """Forward of `subnet`: z [B, IN], w [OUT, IN] (PyTorch layout), b [OUT] -> [B, OUT]."""
    B, IN = z.shape
    OUT, IN_w = w.shape
    assert IN == IN_w and b.shape == (OUT,)
    cost = pl.CostEstimate(
        flops=2 * B * IN * OUT,
        transcendentals=0,
        bytes_accessed=4 * (B * IN + OUT * IN + B * OUT),
    )

    if OUT == 1:
        # Lane-dense [1, B] kernel output; reshape to [B, 1] is free (same order).
        out_t = pl.pallas_call(
            _linear_out1_kernel,
            out_shape=jax.ShapeDtypeStruct((1, B), z.dtype),
            in_specs=[
                pl.BlockSpec(memory_space=pltpu.MemorySpace.VMEM),   # z  [B, IN]
                pl.BlockSpec(memory_space=pltpu.MemorySpace.VMEM),   # w  [1, IN]
                pl.BlockSpec(memory_space=pltpu.MemorySpace.SMEM),   # b  scalar
            ],
            out_specs=pl.BlockSpec(memory_space=pltpu.MemorySpace.VMEM),
            cost_estimate=cost,
        )(z, w, b)
        return out_t.reshape(B, OUT)

    if OUT <= 8:
        return pl.pallas_call(
            _linear_small_out_kernel,
            out_shape=jax.ShapeDtypeStruct((B, OUT), z.dtype),
            in_specs=[pl.BlockSpec(memory_space=pltpu.MemorySpace.VMEM)] * 3,
            out_specs=pl.BlockSpec(memory_space=pltpu.MemorySpace.VMEM),
            cost_estimate=cost,
        )(z, w, b.reshape(1, OUT))

    # General OUT > 8: MXU matmul, tiled over B rows (VMEM guard for large B).
    tb = _row_tile(B)
    grid = (B // tb,)
    return pl.pallas_call(
        _linear_mxu_kernel,
        out_shape=jax.ShapeDtypeStruct((B, OUT), z.dtype),
        grid=grid,
        in_specs=[
            pl.BlockSpec((tb, IN), lambda i: (i, 0)),
            pl.BlockSpec((OUT, IN), lambda i: (0, 0)),
            pl.BlockSpec((1, OUT), lambda i: (0, 0)),
        ],
        out_specs=pl.BlockSpec((tb, OUT), lambda i: (i, 0)),
        compiler_params=pltpu.CompilerParams(dimension_semantics=("parallel",)),
        cost_estimate=cost,
    )(z, w, b.reshape(1, OUT))


def batched_subnet_forward(z, w, b):
    """N independent OUT=1 subnets in ONE kernel (amortizes launch + DMA).

    z: [N, B, IN] per-subnet inputs, w: [N, IN], b: [N]  ->  out [B, N]
    (out[b, n] = z[n, b] . w[n] + b[n]; subnets on the lane axis = lane-dense stores).
    """
    N, B, IN = z.shape
    assert w.shape == (N, IN) and b.shape == (N,)
    ts = 128 if N % 128 == 0 else N          # one full vreg lane width per grid step
    grid = (N // ts,)
    cost = pl.CostEstimate(
        flops=2 * N * B * IN,
        transcendentals=0,
        bytes_accessed=4 * (N * B * IN + N * IN + N + B * N),
    )
    return pl.pallas_call(
        _batched_out1_kernel,
        out_shape=jax.ShapeDtypeStruct((B, N), z.dtype),
        grid=grid,
        in_specs=[
            pl.BlockSpec((ts, B, IN), lambda n: (n, 0, 0)),   # per-subnet inputs
            pl.BlockSpec((ts, IN), lambda n: (n, 0)),         # stacked weights
            pl.BlockSpec((1, ts), lambda n: (0, n)),          # stacked biases
        ],
        out_specs=pl.BlockSpec((B, ts), lambda n: (0, n)),
        compiler_params=pltpu.CompilerParams(dimension_semantics=("parallel",)),
        cost_estimate=cost,
    )(z, w, b.reshape(1, N))


# ----------------------------------------------------------------------------
# Demo / correctness checks
# ----------------------------------------------------------------------------

if __name__ == "__main__":
    key = jax.random.PRNGKey(0)
    ks = jax.random.split(key, 12)

    IN_FEATURES = 32
    bound = 1.0 / (IN_FEATURES ** 0.5)   # nn.Linear init: uniform(-1/sqrt(in), 1/sqrt(in))

    # --- 1) module default config: input=32, out=1 ---------------------------
    B1, OUT1 = 8, 1
    w1 = jax.random.uniform(ks[0], (OUT1, IN_FEATURES), minval=-bound, maxval=bound,
                            dtype=jnp.float32)
    b1 = jax.random.uniform(ks[1], (OUT1,), minval=-bound, maxval=bound, dtype=jnp.float32)
    z1 = jax.random.normal(ks[2], (B1, IN_FEATURES), dtype=jnp.float32)
    out1 = jax.block_until_ready(subnet_forward(z1, w1, b1))
    ref1 = z1 @ w1.T + b1
    assert out1.shape == (B1, OUT1)
    assert jnp.allclose(out1, ref1, atol=1e-5, rtol=1e-5)

    # --- 2) small OUT (VPU fast path), OUT = 8 --------------------------------
    B2, OUT2 = 8, 8
    w2 = jax.random.uniform(ks[3], (OUT2, IN_FEATURES), minval=-bound, maxval=bound,
                            dtype=jnp.float32)
    b2 = jax.random.uniform(ks[4], (OUT2,), minval=-bound, maxval=bound, dtype=jnp.float32)
    z2 = jax.random.normal(ks[5], (B2, IN_FEATURES), dtype=jnp.float32)
    out2 = jax.block_until_ready(subnet_forward(z2, w2, b2))
    ref2 = z2 @ w2.T + b2
    assert out2.shape == (B2, OUT2)
    assert jnp.allclose(out2, ref2, atol=1e-5, rtol=1e-5)

    # --- 3) general MXU path with a row-tiled grid over B ---------------------
    B3, OUT3 = 512, 64
    w3 = jax.random.uniform(ks[6], (OUT3, IN_FEATURES), minval=-bound, maxval=bound,
                            dtype=jnp.float32)
    b3 = jax.random.uniform(ks[7], (OUT3,), minval=-bound, maxval=bound, dtype=jnp.float32)
    z3 = jax.random.normal(ks[8], (B3, IN_FEATURES), dtype=jnp.float32)
    out3 = jax.block_until_ready(subnet_forward(z3, w3, b3))
    ref3 = jnp.dot(z3, w3.T, precision=jax.lax.Precision.HIGHEST) + b3
    assert out3.shape == (B3, OUT3)
    assert jnp.allclose(out3, ref3, atol=1e-4, rtol=1e-4)

    # --- 4) batched subnets: N independent OUT=1 linears in one kernel --------
    N, B4 = 256, 8
    zb = jax.random.normal(ks[9], (N, B4, IN_FEATURES), dtype=jnp.float32)
    wb = jax.random.uniform(ks[10], (N, IN_FEATURES), minval=-bound, maxval=bound,
                            dtype=jnp.float32)
    bb = jax.random.uniform(ks[11], (N,), minval=-bound, maxval=bound, dtype=jnp.float32)
    outb = jax.block_until_ready(batched_subnet_forward(zb, wb, bb))
    refb = jnp.sum(zb * wb[:, None, :], axis=-1).T + bb[None, :]   # [B, N]
    assert outb.shape == (B4, N)
    assert jnp.allclose(outb, refb, atol=1e-5, rtol=1e-5)

    print("KERNEL_OK")
</pallas_src>

<mosaic_0001>
module attributes {stable_mosaic.version = 11 : i64} {
  func.func @_linear_out1_kernel(%arg0: memref<8x32xf32, #tpu.memory_space<vmem>>, %arg1: memref<1x32xf32, #tpu.memory_space<vmem>>, %arg2: memref<1xf32, #tpu.memory_space<smem>>, %arg3: memref<1x8xf32, #tpu.memory_space<vmem>>) attributes {dimension_semantics = [], scalar_prefetch = 0 : i64, scratch_operands = 0 : i64, tpu.core_type = #tpu.core_type<tc>} {
    %c0 = arith.constant 0 : index
    %c0_0 = arith.constant 0 : index
    %0 = vector.load %arg0[%c0, %c0_0] : memref<8x32xf32, #tpu.memory_space<vmem>>, vector<8x32xf32>
    %c0_1 = arith.constant 0 : index
    %c0_2 = arith.constant 0 : index
    %1 = vector.load %arg1[%c0_1, %c0_2] : memref<1x32xf32, #tpu.memory_space<vmem>>, vector<1x32xf32>
    %2 = vector.broadcast %1 : vector<1x32xf32> to vector<8x32xf32>
    %3 = arith.mulf %0, %2 : vector<8x32xf32>
    %cst = arith.constant dense<0.000000e+00> : vector<8xf32>
    %4 = vector.multi_reduction <add>, %3, %cst [1] : vector<8x32xf32> to vector<8xf32>
    %5 = vector.shape_cast %4 : vector<8xf32> to vector<8x1xf32>
    %6 = tpu.transpose %5, [1, 0] : vector<8x1xf32> -> vector<1x8xf32>
    %c0_3 = arith.constant 0 : index
    %7 = memref.load %arg2[%c0_3] : memref<1xf32, #tpu.memory_space<smem>>
    %8 = vector.broadcast %7 : f32 to vector<1x8xf32>
    %9 = arith.addf %6, %8 : vector<1x8xf32>
    %c0_4 = arith.constant 0 : index
    %c0_5 = arith.constant 0 : index
    %10 = vector.load %arg3[%c0_4, %c0_5] : memref<1x8xf32, #tpu.memory_space<vmem>>, vector<1x8xf32>
    tpu.vector_store %arg3[%c0_4, %c0_5], %9 {strides = array<i32>} : memref<1x8xf32, #tpu.memory_space<vmem>>, vector<1x8xf32>,
    return
  }
}

</mosaic_0001>

<llo_original>
// kernel: tpu_custom_call.1
$region0: #{tpu_custom_call.1}
  #allocation0 [shape = 'u32[]', space=smem, size = 0x4, offset = 0x4, fixed_abs, tag = 'smem constant byte address 0x4 - core index']
  #allocation1 [shape = 'u32[144,128]{1,0:T(1,128)}', space=vmem, size = 0x12000, scoped, tag = 'internal scratch']
  #allocation2 [shape = 'f32[1]{0:T(128)S(6)}', space=smem, size = 0x200, scoped, tag = 'scoped memory for tpu_custom_call.1']
  %s0 = inlined_call_operand.hbm [shape: f32[8,32], index: 0, kind: input, shape index: {}]
  %s1 = inlined_call_operand.vmem [shape: f32[1,32], index: 1, kind: input, shape index: {}]
  %s2 = inlined_call_operand.<no memory space> [shape: f32[1], index: 2, kind: input, shape index: {}]
  %s3 = inlined_call_operand.hbm [shape: f32[1,8], index: 3, kind: output, shape index: {}]
  %s4 = sld [smem:[#allocation0]]
  $region26: #{tpu_custom_call.1} parent=0
    _
  %s6 = ssub.s32 1, %s4
  %s7 = scalar_select 0, %s6, %s4
  %8 = sst [smem:[#allocation2]] %s2
  $region1: #{tpu_custom_call.1} parent=0
    #allocation3 [shape = 'u8[4096]{0}', space=vmem, size = 0x1000, scoped, tag = 'input window, operand 0, single buffered']
    #allocation4 [shape = 's32[1]{0}', space=sflag, size = 0x4, scoped, tag = 'scoped memory for tpu_custom_call.1']
    #allocation5 [shape = 's32[1]{0}', space=sflag, size = 0x4, scoped, tag = 'scoped memory for tpu_custom_call.1']
    #allocation6 [shape = 'u8[512]{0}', space=vmem, size = 0x400, scoped, tag = 'output window, operand 0, single buffered']
    %9 = vsyncpa [#allocation4], 0
    %10 = vsyncpa [#allocation5], 0
    // Predicated region
    $region2: #{tpu_custom_call.1} parent=1 // pred_check
      _
    $region3: #{tpu_custom_call.1} parent=1 // pred_check_branch
      %12 = sbr.rel (0) target = $region5
    $region4: #{tpu_custom_call.1} parent=1 // pred_region
      %s14 = ssub.s32 128, 128
      %15 = vsyncadd [#allocation4], %s14
      %s17 = sshll.u32 [#allocation3], 4
      %s18 = int_to_ptr.vmem [resolvable:$true] %s17
      %20 = dma.hbm_to_vmem [thread:$0]  %s0, 128, %s18, [#allocation4]
    $region5: #{tpu_custom_call.1} parent=1 // pred_fallthru
      _
    // Predicated region
    $region6: #{tpu_custom_call.1} parent=1 // pred_check
      _
    $region7: #{tpu_custom_call.1} parent=1 // pred_check_branch
      %22 = sbr.rel (0) target = $region9
    $region8: #{tpu_custom_call.1} parent=1 // pred_region
      _
    $region9: #{tpu_custom_call.1} parent=1 // pred_fallthru
      _
    // Predicated region
    $region10: #{tpu_custom_call.1} parent=1 // pred_check
      _
    $region11: #{tpu_custom_call.1} parent=1 // pred_check_branch
      %24 = sbr.rel (0) target = $region13
    $region12: #{tpu_custom_call.1} parent=1 // pred_region
      _
    $region13: #{tpu_custom_call.1} parent=1 // pred_fallthru
      _
    // Predicated region
    $region14: #{tpu_custom_call.1} parent=1 // pred_check
      _
    $region15: #{tpu_custom_call.1} parent=1 // pred_check_branch
      %26 = sbr.rel (0) target = $region17
    $region16: #{tpu_custom_call.1} parent=1 // pred_region
      %27 = dma.done [#allocation4], 128
    $region17: #{tpu_custom_call.1} parent=1 // pred_fallthru
      _
    %v28 = vld [vmem:[#allocation3] sm:$0xff]
    %v29 = vld [vmem:[%s1] sm:$0x1]
    %v31 = vlaneseq
    %v32 = vshrl.u32 %v31, 7
    %v33 = vsub.s32 0, %v32
    %v34 = vrot.slane %v29, %v33
    %v36 = vmul.f32 %v28, %v34
    %vm37 = vcmask 261120
    %v38 = vsel %vm37, %v36, 0.0
    %39 = vadd.xlane.f32.xlu0 %v38
    %v40 = vpop.xlane.xlu0 %39
    %41 = vxpose.xlu0.b32.start [1/16] %v40, 128
    %42 = vxpose.xlu0.b32.cont [2/16] 0.0, 128
    %43 = vxpose.xlu0.b32.cont [3/16] 0.0, 128
    %44 = vxpose.xlu0.b32.cont [4/16] 0.0, 128
    %45 = vxpose.xlu0.b32.cont [5/16] 0.0, 128
    %46 = vxpose.xlu0.b32.cont [6/16] 0.0, 128
    %47 = vxpose.xlu0.b32.cont [7/16] 0.0, 128
    %48 = vxpose.xlu0.b32.cont [8/16] 0.0, 128
    %49 = vxpose.xlu0.b32.cont [9/16] 0.0, 128
    %50 = vxpose.xlu0.b32.cont [10/16] 0.0, 128
    %51 = vxpose.xlu0.b32.cont [11/16] 0.0, 128
    %52 = vxpose.xlu0.b32.cont [12/16] 0.0, 128
    %53 = vxpose.xlu0.b32.cont [13/16] 0.0, 128
    %54 = vxpose.xlu0.b32.cont [14/16] 0.0, 128
    %55 = vxpose.xlu0.b32.cont [15/16] 0.0, 128
    %56 = vxpose.xlu0.b32.end [16/16] 0.0, 128
    %v57 = vpop.trf.xlu0
    %v58 = vpop.trf.xlu0
    %v59 = vpop.trf.xlu0
    %v60 = vpop.trf.xlu0
    %v61 = vpop.trf.xlu0
    %v62 = vpop.trf.xlu0
    %v63 = vpop.trf.xlu0
    %v64 = vpop.trf.xlu0
    %v65 = vpop.trf.xlu0
    %v66 = vpop.trf.xlu0
    %v67 = vpop.trf.xlu0
    %v68 = vpop.trf.xlu0
    %v69 = vpop.trf.xlu0
    %v70 = vpop.trf.xlu0
    %v71 = vpop.trf.xlu0
    %v72 = vpop.trf.xlu0
    %s73 = sld [smem:[#allocation2]]
    %v74 = vstv %s73
    %v75 = vadd.f32 %v57, %v74
    %vm76 = vcmask 57344
    %77 = vst.msk [vmem:[#allocation6] sm:$0x1] %vm76, %v75
    // Predicated region
    $region18: #{tpu_custom_call.1} parent=1 // pred_check
      _
    $region19: #{tpu_custom_call.1} parent=1 // pred_check_branch
      %79 = sbr.rel (0) target = $region21
    $region20: #{tpu_custom_call.1} parent=1 // pred_region
      %s81 = ssub.s32 16, 16
      %82 = vsyncadd [#allocation5], %s81
      %s84 = sshll.u32 [#allocation6], 4
      %s85 = int_to_ptr.vmem [resolvable:$true] %s84
      %87 = dma.vmem_to_hbm [thread:$0]  %s85, 16, %s3, [#allocation5]
    $region21: #{tpu_custom_call.1} parent=1 // pred_fallthru
      _
    // Predicated region
    $region22: #{tpu_custom_call.1} parent=1 // pred_check
      _
    $region23: #{tpu_custom_call.1} parent=1 // pred_check_branch
      %89 = sbr.rel (0) target = $region25
    $region24: #{tpu_custom_call.1} parent=1 // pred_region
      %90 = dma.done [#allocation5], 16
    $region25: #{tpu_custom_call.1} parent=1 // pred_fallthru
      _
    %91 = vsyncpa [#allocation4], 1
    %92 = vsyncpa [#allocation5], 1

</llo_original>
